<compile_context>
chip_gen: v6e
topology: v6e:2x2x1
jax: 0.10.0
libtpu: 0.0.40
codegen_flags: <defaults>
</compile_context>

<pallas_src>
import functools

import jax
import jax.numpy as jnp
from jax.experimental import pallas as pl
from jax.experimental.pallas import tpu as pltpu  # noqa: F401  (kept for parity with TPU backend)

BN_EPS = 1e-5


def _dense_stack_kernel(*refs, relu_flags, layer_dims, inv_m):
    """Fused [Linear(bf16 matmul) -> BatchNorm1d(train, f32) -> (ReLU)] x L in VMEM.

    refs layout: (x_ref, w0, w1, ..., w_{L-1}, gb_ref, o_ref)
      w_i   : (K_i, N_i) bf16 (already transposed)
      gb_ref: (2*L, max_N) f32 -- row 2i = gamma_i, row 2i+1 = beta_i
    """
    x_ref = refs[0]
    gb_ref = refs[-2]
    o_ref = refs[-1]
    w_refs = refs[1:-2]

    h = x_ref[...].astype(jnp.float32)
    for i, (relu, n) in enumerate(zip(relu_flags, layer_dims)):
        # MXU matmul: bf16 operands, f32 accumulate.  Linear bias intentionally
        # omitted (cancelled exactly by the batch-mean subtraction below).
        z = jnp.dot(h.astype(jnp.bfloat16), w_refs[i][...],
                    preferred_element_type=jnp.float32)

        # BatchNorm1d, training mode -- one-pass stats:
        #   mean = E[z],  var = E[z^2] - mean^2
        # (both XLU reductions issued back-to-back, no (M,N) subtract needed).
        mean = jnp.sum(z, axis=0, keepdims=True) * inv_m            # (1, N)
        mean_sq = jnp.sum(z * z, axis=0, keepdims=True) * inv_m     # (1, N)
        var = mean_sq - mean * mean

        gb = gb_ref[2 * i:2 * i + 2, :n]                            # (2, N) f32
        s = gb[0:1] * jax.lax.rsqrt(var + BN_EPS)                   # gamma * inv_std
        t = gb[1:2] - mean * s                                      # beta - mean*s
        h = z * s + t                                               # 2 VALU ops / element
        if relu:
            h = jnp.maximum(h, 0.0)
    o_ref[...] = h.astype(o_ref.dtype)


def fused_dense_stack(x, w_bf16_list, gb_packed, relu_flags, layer_dims):
    """Run the whole dense stack in a single pallas_call.

    x           : (M, in_len) float32
    w_bf16_list : list of (K_i, N_i) bf16 transposed weights
    gb_packed   : (2*L, max_N) float32 packed gamma/beta
    """
    M = x.shape[0]
    num_cls = layer_dims[-1]

    kernel = functools.partial(
        _dense_stack_kernel,
        relu_flags=relu_flags,
        layer_dims=layer_dims,
        inv_m=1.0 / M,
    )
    return pl.pallas_call(
        kernel,
        out_shape=jax.ShapeDtypeStruct((M, num_cls), jnp.float32),
        # No grid: all inputs / the output are whole-array VMEM blocks.
        # Resident footprint: ~0.35 MB bf16 weights + one (8, 256) gamma/beta
        # tile + (M, 256) f32 activations -- well under VMEM even on v7x (64 MiB).
    )(x, *w_bf16_list, gb_packed)


class TourClassificationBasePallas:
    """JAX/Pallas port of TourClassificationBase with a get_dense training model."""

    def __init__(self, in_len, num_cls=128, h_width=256, h_height=2,
                 key=jax.random.PRNGKey(0)):
        self.num_cls = num_cls
        dims = [in_len] + [h_width] * (1 + h_height) + [num_cls]
        relu_flags = [True] * (1 + h_height) + [False]   # last block: Linear + BN only

        self.layers = []          # f32 params (PyTorch-faithful, used by reference)
        for i, (din, dout) in enumerate(zip(dims[:-1], dims[1:])):
            key, kw, kb = jax.random.split(key, 3)
            # kaiming_normal_ (fan_in, gain=sqrt(2)) on Linear weight (dout, din)
            std = (2.0 / din) ** 0.5
            w = jax.random.normal(kw, (dout, din), jnp.float32) * std
            # nn.Linear default bias init: U(-1/sqrt(fan_in), 1/sqrt(fan_in)).
            # Kept only for the PyTorch-faithful reference; the kernel drops it.
            bound = 1.0 / (din ** 0.5)
            b = jax.random.uniform(kb, (dout,), jnp.float32, -bound, bound)
            gamma = jnp.ones((dout,), jnp.float32)
            beta = jnp.zeros((dout,), jnp.float32)
            self.layers.append((w.T, b, gamma, beta, relu_flags[i]))

        # --- precomputed kernel-side parameter layout ----------------------
        self._relu_flags = tuple(relu_flags)
        self._layer_dims = tuple(dims[1:])
        self._w_bf16 = [w_t.astype(jnp.bfloat16) for (w_t, _b, _g, _be, _r) in self.layers]
        L = len(self.layers)
        max_n = max(self._layer_dims)
        gb = jnp.zeros((2 * L, max_n), jnp.float32)
        for i, (_w, _b, gamma, beta, _r) in enumerate(self.layers):
            n = gamma.shape[0]
            gb = gb.at[2 * i, :n].set(gamma)
            gb = gb.at[2 * i + 1, :n].set(beta)
        self._gb_packed = gb

    def _embed_pipe(self, x):
        # Base class raises NotImplementedError; identity embedding here.
        return x

    def _training_pipe(self, embed):
        return fused_dense_stack(embed, self._w_bf16, self._gb_packed,
                                 self._relu_flags, self._layer_dims)

    def forward(self, x):
        embed = self._embed_pipe(x)
        return self._training_pipe(embed)

    __call__ = forward


def _reference_forward(model, x):
    """Pure-JAX reference with PyTorch forward semantics (incl. the Linear bias,
    two-pass BN stats) and the same bf16 matmul-operand precision as the kernel."""
    for w_t, b, gamma, beta, relu in model.layers:
        z = jnp.dot(x.astype(jnp.bfloat16), w_t.astype(jnp.bfloat16),
                    preferred_element_type=jnp.float32) + b
        mean = jnp.mean(z, axis=0, keepdims=True)
        var = jnp.mean((z - mean) ** 2, axis=0, keepdims=True)
        z = (z - mean) * jax.lax.rsqrt(var + BN_EPS) * gamma + beta
        x = jnp.maximum(z, 0.0) if relu else z
    return x


if __name__ == "__main__":
    key = jax.random.PRNGKey(0)
    k_param, k_x = jax.random.split(key)

    batch, in_len, num_cls, h_width, h_height = 8, 32, 128, 256, 2
    model = TourClassificationBasePallas(in_len, num_cls=num_cls,
                                         h_width=h_width, h_height=h_height,
                                         key=k_param)

    x = jax.random.normal(k_x, (batch, in_len), jnp.float32)

    out = model(x)
    out = jax.block_until_ready(out)
    assert out.shape == (batch, num_cls), out.shape

    ref = _reference_forward(model, x)
    assert jnp.allclose(out, ref, atol=2e-3, rtol=2e-3), (
        "mismatch vs reference, max abs diff = %f" % float(jnp.max(jnp.abs(out - ref))))

    print("KERNEL_OK")
</pallas_src>

<mosaic_0001>
module attributes {stable_mosaic.version = 11 : i64} {
  func.func @_dense_stack_kernel(%arg0: memref<8x32xf32, #tpu.memory_space<vmem>>, %arg1: memref<32x256xbf16, #tpu.memory_space<vmem>>, %arg2: memref<256x256xbf16, #tpu.memory_space<vmem>>, %arg3: memref<256x256xbf16, #tpu.memory_space<vmem>>, %arg4: memref<256x128xbf16, #tpu.memory_space<vmem>>, %arg5: memref<8x256xf32, #tpu.memory_space<vmem>>, %arg6: memref<8x128xf32, #tpu.memory_space<vmem>>) attributes {dimension_semantics = [], scalar_prefetch = 0 : i64, scratch_operands = 0 : i64, tpu.core_type = #tpu.core_type<tc>} {
    %c0 = arith.constant 0 : index
    %c0_0 = arith.constant 0 : index
    %0 = vector.load %arg0[%c0, %c0_0] : memref<8x32xf32, #tpu.memory_space<vmem>>, vector<8x32xf32>
    %1 = arith.truncf %0 : vector<8x32xf32> to vector<8x32xbf16>
    %c0_1 = arith.constant 0 : index
    %c0_2 = arith.constant 0 : index
    %2 = vector.load %arg1[%c0_1, %c0_2] : memref<32x256xbf16, #tpu.memory_space<vmem>>, vector<32x256xbf16>
    %cst = arith.constant dense<0.000000e+00> : vector<8x256xf32>
    %3 = tpu.matmul %1, %2, %cst {dimension_numbers = #tpu.dot_dimension_numbers<[1], [0], [0], [1], [0, 0, 1, 1], [], []>} : vector<8x32xbf16>, vector<32x256xbf16>, vector<8x256xf32> -> vector<8x256xf32>
    %cst_3 = arith.constant dense<0.000000e+00> : vector<256xf32>
    %4 = vector.multi_reduction <add>, %3, %cst_3 [0] : vector<8x256xf32> to vector<256xf32>
    %5 = vector.shape_cast %4 : vector<256xf32> to vector<1x256xf32>
    %cst_4 = arith.constant 1.250000e-01 : f32
    %6 = vector.broadcast %cst_4 : f32 to vector<1x256xf32>
    %7 = arith.mulf %5, %6 : vector<1x256xf32>
    %8 = arith.mulf %3, %3 : vector<8x256xf32>
    %cst_5 = arith.constant dense<0.000000e+00> : vector<256xf32>
    %9 = vector.multi_reduction <add>, %8, %cst_5 [0] : vector<8x256xf32> to vector<256xf32>
    %10 = vector.shape_cast %9 : vector<256xf32> to vector<1x256xf32>
    %cst_6 = arith.constant 1.250000e-01 : f32
    %11 = vector.broadcast %cst_6 : f32 to vector<1x256xf32>
    %12 = arith.mulf %10, %11 : vector<1x256xf32>
    %13 = arith.mulf %7, %7 : vector<1x256xf32>
    %14 = arith.subf %12, %13 : vector<1x256xf32>
    %c0_7 = arith.constant 0 : index
    %c0_8 = arith.constant 0 : index
    %15 = vector.load %arg5[%c0_7, %c0_8] : memref<8x256xf32, #tpu.memory_space<vmem>>, vector<2x256xf32>
    %16 = vector.extract_strided_slice %15 {offsets = [0, 0], sizes = [1, 256], strides = [1, 1]} : vector<2x256xf32> to vector<1x256xf32>
    %cst_9 = arith.constant 9.99999974E-6 : f32
    %17 = vector.broadcast %cst_9 : f32 to vector<1x256xf32>
    %18 = arith.addf %14, %17 : vector<1x256xf32>
    %19 = math.rsqrt %18 : vector<1x256xf32>
    %20 = arith.mulf %16, %19 : vector<1x256xf32>
    %21 = vector.extract_strided_slice %15 {offsets = [1, 0], sizes = [1, 256], strides = [1, 1]} : vector<2x256xf32> to vector<1x256xf32>
    %22 = arith.mulf %7, %20 : vector<1x256xf32>
    %23 = arith.subf %21, %22 : vector<1x256xf32>
    %24 = vector.broadcast %20 : vector<1x256xf32> to vector<8x256xf32>
    %25 = arith.mulf %3, %24 : vector<8x256xf32>
    %26 = vector.broadcast %23 : vector<1x256xf32> to vector<8x256xf32>
    %27 = arith.addf %25, %26 : vector<8x256xf32>
    %cst_10 = arith.constant 0.000000e+00 : f32
    %28 = vector.broadcast %cst_10 : f32 to vector<8x256xf32>
    %29 = arith.maximumf %27, %28 : vector<8x256xf32>
    %30 = arith.truncf %29 : vector<8x256xf32> to vector<8x256xbf16>
    %c0_11 = arith.constant 0 : index
    %c0_12 = arith.constant 0 : index
    %31 = vector.load %arg2[%c0_11, %c0_12] : memref<256x256xbf16, #tpu.memory_space<vmem>>, vector<256x256xbf16>
    %cst_13 = arith.constant dense<0.000000e+00> : vector<8x256xf32>
    %32 = tpu.matmul %30, %31, %cst_13 {dimension_numbers = #tpu.dot_dimension_numbers<[1], [0], [0], [1], [0, 0, 1, 1], [], []>} : vector<8x256xbf16>, vector<256x256xbf16>, vector<8x256xf32> -> vector<8x256xf32>
    %cst_14 = arith.constant dense<0.000000e+00> : vector<256xf32>
    %33 = vector.multi_reduction <add>, %32, %cst_14 [0] : vector<8x256xf32> to vector<256xf32>
    %34 = vector.shape_cast %33 : vector<256xf32> to vector<1x256xf32>
    %cst_15 = arith.constant 1.250000e-01 : f32
    %35 = vector.broadcast %cst_15 : f32 to vector<1x256xf32>
    %36 = arith.mulf %34, %35 : vector<1x256xf32>
    %37 = arith.mulf %32, %32 : vector<8x256xf32>
    %cst_16 = arith.constant dense<0.000000e+00> : vector<256xf32>
    %38 = vector.multi_reduction <add>, %37, %cst_16 [0] : vector<8x256xf32> to vector<256xf32>
    %39 = vector.shape_cast %38 : vector<256xf32> to vector<1x256xf32>
    %cst_17 = arith.constant 1.250000e-01 : f32
    %40 = vector.broadcast %cst_17 : f32 to vector<1x256xf32>
    %41 = arith.mulf %39, %40 : vector<1x256xf32>
    %42 = arith.mulf %36, %36 : vector<1x256xf32>
    %43 = arith.subf %41, %42 : vector<1x256xf32>
    %c2 = arith.constant 2 : index
    %c0_18 = arith.constant 0 : index
    %44 = vector.load %arg5[%c2, %c0_18] : memref<8x256xf32, #tpu.memory_space<vmem>>, vector<2x256xf32>
    %45 = vector.extract_strided_slice %44 {offsets = [0, 0], sizes = [1, 256], strides = [1, 1]} : vector<2x256xf32> to vector<1x256xf32>
    %cst_19 = arith.constant 9.99999974E-6 : f32
    %46 = vector.broadcast %cst_19 : f32 to vector<1x256xf32>
    %47 = arith.addf %43, %46 : vector<1x256xf32>
    %48 = math.rsqrt %47 : vector<1x256xf32>
    %49 = arith.mulf %45, %48 : vector<1x256xf32>
    %50 = vector.extract_strided_slice %44 {offsets = [1, 0], sizes = [1, 256], strides = [1, 1]} : vector<2x256xf32> to vector<1x256xf32>
    %51 = arith.mulf %36, %49 : vector<1x256xf32>
    %52 = arith.subf %50, %51 : vector<1x256xf32>
    %53 = vector.broadcast %49 : vector<1x256xf32> to vector<8x256xf32>
    %54 = arith.mulf %32, %53 : vector<8x256xf32>
    %55 = vector.broadcast %52 : vector<1x256xf32> to vector<8x256xf32>
    %56 = arith.addf %54, %55 : vector<8x256xf32>
    %cst_20 = arith.constant 0.000000e+00 : f32
    %57 = vector.broadcast %cst_20 : f32 to vector<8x256xf32>
    %58 = arith.maximumf %56, %57 : vector<8x256xf32>
    %59 = arith.truncf %58 : vector<8x256xf32> to vector<8x256xbf16>
    %c0_21 = arith.constant 0 : index
    %c0_22 = arith.constant 0 : index
    %60 = vector.load %arg3[%c0_21, %c0_22] : memref<256x256xbf16, #tpu.memory_space<vmem>>, vector<256x256xbf16>
    %cst_23 = arith.constant dense<0.000000e+00> : vector<8x256xf32>
    %61 = tpu.matmul %59, %60, %cst_23 {dimension_numbers = #tpu.dot_dimension_numbers<[1], [0], [0], [1], [0, 0, 1, 1], [], []>} : vector<8x256xbf16>, vector<256x256xbf16>, vector<8x256xf32> -> vector<8x256xf32>
    %cst_24 = arith.constant dense<0.000000e+00> : vector<256xf32>
    %62 = vector.multi_reduction <add>, %61, %cst_24 [0] : vector<8x256xf32> to vector<256xf32>
    %63 = vector.shape_cast %62 : vector<256xf32> to vector<1x256xf32>
    %cst_25 = arith.constant 1.250000e-01 : f32
    %64 = vector.broadcast %cst_25 : f32 to vector<1x256xf32>
    %65 = arith.mulf %63, %64 : vector<1x256xf32>
    %66 = arith.mulf %61, %61 : vector<8x256xf32>
    %cst_26 = arith.constant dense<0.000000e+00> : vector<256xf32>
    %67 = vector.multi_reduction <add>, %66, %cst_26 [0] : vector<8x256xf32> to vector<256xf32>
    %68 = vector.shape_cast %67 : vector<256xf32> to vector<1x256xf32>
    %cst_27 = arith.constant 1.250000e-01 : f32
    %69 = vector.broadcast %cst_27 : f32 to vector<1x256xf32>
    %70 = arith.mulf %68, %69 : vector<1x256xf32>
    %71 = arith.mulf %65, %65 : vector<1x256xf32>
    %72 = arith.subf %70, %71 : vector<1x256xf32>
    %c4 = arith.constant 4 : index
    %c0_28 = arith.constant 0 : index
    %73 = vector.load %arg5[%c4, %c0_28] : memref<8x256xf32, #tpu.memory_space<vmem>>, vector<2x256xf32>
    %74 = vector.extract_strided_slice %73 {offsets = [0, 0], sizes = [1, 256], strides = [1, 1]} : vector<2x256xf32> to vector<1x256xf32>
    %cst_29 = arith.constant 9.99999974E-6 : f32
    %75 = vector.broadcast %cst_29 : f32 to vector<1x256xf32>
    %76 = arith.addf %72, %75 : vector<1x256xf32>
    %77 = math.rsqrt %76 : vector<1x256xf32>
    %78 = arith.mulf %74, %77 : vector<1x256xf32>
    %79 = vector.extract_strided_slice %73 {offsets = [1, 0], sizes = [1, 256], strides = [1, 1]} : vector<2x256xf32> to vector<1x256xf32>
    %80 = arith.mulf %65, %78 : vector<1x256xf32>
    %81 = arith.subf %79, %80 : vector<1x256xf32>
    %82 = vector.broadcast %78 : vector<1x256xf32> to vector<8x256xf32>
    %83 = arith.mulf %61, %82 : vector<8x256xf32>
    %84 = vector.broadcast %81 : vector<1x256xf32> to vector<8x256xf32>
    %85 = arith.addf %83, %84 : vector<8x256xf32>
    %cst_30 = arith.constant 0.000000e+00 : f32
    %86 = vector.broadcast %cst_30 : f32 to vector<8x256xf32>
    %87 = arith.maximumf %85, %86 : vector<8x256xf32>
    %88 = arith.truncf %87 : vector<8x256xf32> to vector<8x256xbf16>
    %c0_31 = arith.constant 0 : index
    %c0_32 = arith.constant 0 : index
    %89 = vector.load %arg4[%c0_31, %c0_32] : memref<256x128xbf16, #tpu.memory_space<vmem>>, vector<256x128xbf16>
    %cst_33 = arith.constant dense<0.000000e+00> : vector<8x128xf32>
    %90 = tpu.matmul %88, %89, %cst_33 {dimension_numbers = #tpu.dot_dimension_numbers<[1], [0], [0], [1], [0, 0, 1, 1], [], []>} : vector<8x256xbf16>, vector<256x128xbf16>, vector<8x128xf32> -> vector<8x128xf32>
    %cst_34 = arith.constant dense<0.000000e+00> : vector<128xf32>
    %91 = vector.multi_reduction <add>, %90, %cst_34 [0] : vector<8x128xf32> to vector<128xf32>
    %92 = vector.shape_cast %91 : vector<128xf32> to vector<1x128xf32>
    %cst_35 = arith.constant 1.250000e-01 : f32
    %93 = vector.broadcast %cst_35 : f32 to vector<1x128xf32>
    %94 = arith.mulf %92, %93 : vector<1x128xf32>
    %95 = arith.mulf %90, %90 : vector<8x128xf32>
    %cst_36 = arith.constant dense<0.000000e+00> : vector<128xf32>
    %96 = vector.multi_reduction <add>, %95, %cst_36 [0] : vector<8x128xf32> to vector<128xf32>
    %97 = vector.shape_cast %96 : vector<128xf32> to vector<1x128xf32>
    %cst_37 = arith.constant 1.250000e-01 : f32
    %98 = vector.broadcast %cst_37 : f32 to vector<1x128xf32>
    %99 = arith.mulf %97, %98 : vector<1x128xf32>
    %100 = arith.mulf %94, %94 : vector<1x128xf32>
    %101 = arith.subf %99, %100 : vector<1x128xf32>
    %c6 = arith.constant 6 : index
    %c0_38 = arith.constant 0 : index
    %102 = vector.load %arg5[%c6, %c0_38] : memref<8x256xf32, #tpu.memory_space<vmem>>, vector<2x128xf32>
    %103 = vector.extract_strided_slice %102 {offsets = [0, 0], sizes = [1, 128], strides = [1, 1]} : vector<2x128xf32> to vector<1x128xf32>
    %cst_39 = arith.constant 9.99999974E-6 : f32
    %104 = vector.broadcast %cst_39 : f32 to vector<1x128xf32>
    %105 = arith.addf %101, %104 : vector<1x128xf32>
    %106 = math.rsqrt %105 : vector<1x128xf32>
    %107 = arith.mulf %103, %106 : vector<1x128xf32>
    %108 = vector.extract_strided_slice %102 {offsets = [1, 0], sizes = [1, 128], strides = [1, 1]} : vector<2x128xf32> to vector<1x128xf32>
    %109 = arith.mulf %94, %107 : vector<1x128xf32>
    %110 = arith.subf %108, %109 : vector<1x128xf32>
    %111 = vector.broadcast %107 : vector<1x128xf32> to vector<8x128xf32>
    %112 = arith.mulf %90, %111 : vector<8x128xf32>
    %113 = vector.broadcast %110 : vector<1x128xf32> to vector<8x128xf32>
    %114 = arith.addf %112, %113 : vector<8x128xf32>
    %c0_40 = arith.constant 0 : index
    %c0_41 = arith.constant 0 : index
    %115 = vector.load %arg6[%c0_40, %c0_41] : memref<8x128xf32, #tpu.memory_space<vmem>>, vector<8x128xf32>
    tpu.vector_store %arg6[%c0_40, %c0_41], %114 {strides = array<i32>} : memref<8x128xf32, #tpu.memory_space<vmem>>, vector<8x128xf32>,
    return
  }
}

</mosaic_0001>

<llo_original>
// kernel: tpu_custom_call.1
$region0: #{tpu_custom_call.1}
  #allocation0 [shape = 'u32[]', space=smem, size = 0x4, offset = 0x4, fixed_abs, tag = 'smem constant byte address 0x4 - core index']
  #allocation1 [shape = 'u32[144,128]{1,0:T(1,128)}', space=vmem, size = 0x12000, scoped, tag = 'internal scratch']
  %s0 = inlined_call_operand.hbm [shape: f32[8,32], index: 0, kind: input, shape index: {}]
  %s1 = inlined_call_operand.hbm [shape: bf16[32,256], index: 1, kind: input, shape index: {}]
  %s2 = inlined_call_operand.hbm [shape: bf16[256,256], index: 2, kind: input, shape index: {}]
  %s3 = inlined_call_operand.hbm [shape: bf16[256,256], index: 3, kind: input, shape index: {}]
  %s4 = inlined_call_operand.hbm [shape: bf16[256,128], index: 4, kind: input, shape index: {}]
  %s5 = inlined_call_operand.hbm [shape: f32[8,256], index: 5, kind: input, shape index: {}]
  %s6 = inlined_call_operand.hbm [shape: f32[8,128], index: 6, kind: output, shape index: {}]
  %s7 = sld [smem:[#allocation0]]
  $region58: #{tpu_custom_call.1} parent=0
    _
  %s9 = ssub.s32 1, %s7
  %s10 = scalar_select 0, %s9, %s7
  $region1: #{tpu_custom_call.1} parent=0
    #allocation2 [shape = 'u8[4096]{0}', space=vmem, size = 0x1000, scoped, tag = 'input window, operand 0, single buffered']
    #allocation3 [shape = 's32[1]{0}', space=sflag, size = 0x4, scoped, tag = 'scoped memory for tpu_custom_call.1']
    #allocation4 [shape = 's32[1]{0}', space=sflag, size = 0x4, scoped, tag = 'scoped memory for tpu_custom_call.1']
    #allocation5 [shape = 'u8[16384]{0}', space=vmem, size = 0x4000, scoped, tag = 'input window, operand 1, single buffered']
    #allocation6 [shape = 's32[1]{0}', space=sflag, size = 0x4, scoped, tag = 'scoped memory for tpu_custom_call.1']
    #allocation7 [shape = 'u8[131072]{0}', space=vmem, size = 0x20000, scoped, tag = 'input window, operand 2, single buffered']
    #allocation8 [shape = 'u8[131072]{0}', space=vmem, size = 0x20000, scoped, tag = 'input window, operand 3, single buffered']
    #allocation9 [shape = 's32[1]{0}', space=sflag, size = 0x4, scoped, tag = 'scoped memory for tpu_custom_call.1']
    #allocation10 [shape = 'u8[65536]{0}', space=vmem, size = 0x10000, scoped, tag = 'input window, operand 4, single buffered']
    #allocation11 [shape = 'u8[8192]{0}', space=vmem, size = 0x2000, scoped, tag = 'input window, operand 5, single buffered']
    #allocation12 [shape = 's32[1]{0}', space=sflag, size = 0x4, scoped, tag = 'scoped memory for tpu_custom_call.1']
    #allocation13 [shape = 'u8[4096]{0}', space=vmem, size = 0x1000, scoped, tag = 'output window, operand 0, single buffered']
    %11 = vsyncpa [#allocation3], 0
    %12 = vsyncpa [#allocation6], 0
    %13 = vsyncpa [#allocation9], 0
    %14 = vsyncpa [#allocation12], 0
    %15 = vsyncpa [#allocation4], 0
    // Predicated region
    $region2: #{tpu_custom_call.1} parent=1 // pred_check
      _
    $region3: #{tpu_custom_call.1} parent=1 // pred_check_branch
      %17 = sbr.rel (0) target = $region5
    $region4: #{tpu_custom_call.1} parent=1 // pred_region
      %s19 = ssub.s32 128, 128
      %20 = vsyncadd [#allocation3], %s19
      %s22 = sshll.u32 [#allocation2], 4
      %s23 = int_to_ptr.vmem [resolvable:$true] %s22
      %25 = dma.hbm_to_vmem [thread:$0]  %s0, 128, %s23, [#allocation3]
    $region5: #{tpu_custom_call.1} parent=1 // pred_fallthru
      _
    // Predicated region
    $region6: #{tpu_custom_call.1} parent=1 // pred_check
      _
    $region7: #{tpu_custom_call.1} parent=1 // pred_check_branch
      %27 = sbr.rel (0) target = $region9
    $region8: #{tpu_custom_call.1} parent=1 // pred_region
      %s29 = ssub.s32 512, 512
      %30 = vsyncadd [#allocation6], %s29
      %s31 = sshll.u32 [#allocation5], 4
      %s32 = int_to_ptr.vmem [resolvable:$true] %s31
      %37 = dma.hbm_to_vmem [thread:$0]  %s1, 512, %s32, [#allocation6], 128, 128, 8
    $region9: #{tpu_custom_call.1} parent=1 // pred_fallthru
      _
    // Predicated region
    $region10: #{tpu_custom_call.1} parent=1 // pred_check
      _
    $region11: #{tpu_custom_call.1} parent=1 // pred_check_branch
      %39 = sbr.rel (0) target = $region13
    $region12: #{tpu_custom_call.1} parent=1 // pred_region
      %s41 = ssub.s32 4096, 4096
      %42 = vsyncadd [#allocation6], %s41
      %s43 = sshll.u32 [#allocation7], 4
      %s44 = int_to_ptr.vmem [resolvable:$true] %s43
      %49 = dma.hbm_to_vmem [thread:$0]  %s2, 4096, %s44, [#allocation6], 128, 128, 8
    $region13: #{tpu_custom_call.1} parent=1 // pred_fallthru
      _
    // Predicated region
    $region14: #{tpu_custom_call.1} parent=1 // pred_check
      _
    $region15: #{tpu_custom_call.1} parent=1 // pred_check_branch
      %51 = sbr.rel (0) target = $region17
    $region16: #{tpu_custom_call.1} parent=1 // pred_region
      %s53 = ssub.s32 4096, 4096
      %54 = vsyncadd [#allocation9], %s53
      %s55 = sshll.u32 [#allocation8], 4
      %s56 = int_to_ptr.vmem [resolvable:$true] %s55
      %61 = dma.hbm_to_vmem [thread:$0]  %s3, 4096, %s56, [#allocation9], 128, 128, 8
    $region17: #{tpu_custom_call.1} parent=1 // pred_fallthru
      _
    // Predicated region
    $region18: #{tpu_custom_call.1} parent=1 // pred_check
      _
    $region19: #{tpu_custom_call.1} parent=1 // pred_check_branch
      %63 = sbr.rel (0) target = $region21
    $region20: #{tpu_custom_call.1} parent=1 // pred_region
      %s65 = ssub.s32 2048, 2048
      %66 = vsyncadd [#allocation9], %s65
      %s67 = sshll.u32 [#allocation10], 4
      %s68 = int_to_ptr.vmem [resolvable:$true] %s67
      %73 = dma.hbm_to_vmem [thread:$0]  %s4, 2048, %s68, [#allocation9], 64, 64, 4
    $region21: #{tpu_custom_call.1} parent=1 // pred_fallthru
      _
    // Predicated region
    $region22: #{tpu_custom_call.1} parent=1 // pred_check
      _
    $region23: #{tpu_custom_call.1} parent=1 // pred_check_branch
      %75 = sbr.rel (0) target = $region25
    $region24: #{tpu_custom_call.1} parent=1 // pred_region
      %s77 = ssub.s32 256, 256
      %78 = vsyncadd [#allocation12], %s77
      %s80 = sshll.u32 [#allocation11], 4
      %s81 = int_to_ptr.vmem [resolvable:$true] %s80
      %83 = dma.hbm_to_vmem [thread:$0]  %s5, 256, %s81, [#allocation12]
    $region25: #{tpu_custom_call.1} parent=1 // pred_fallthru
      _
    // Predicated region
    $region26: #{tpu_custom_call.1} parent=1 // pred_check
      _
    $region27: #{tpu_custom_call.1} parent=1 // pred_check_branch
      %85 = sbr.rel (0) target = $region29
    $region28: #{tpu_custom_call.1} parent=1 // pred_region
      %86 = dma.done [#allocation3], 128
    $region29: #{tpu_custom_call.1} parent=1 // pred_fallthru
      _
    // Predicated region
    $region30: #{tpu_custom_call.1} parent=1 // pred_check
      _
    $region31: #{tpu_custom_call.1} parent=1 // pred_check_branch
      %88 = sbr.rel (0) target = $region33
    $region32: #{tpu_custom_call.1} parent=1 // pred_region
      %89 = dma.done [#allocation6], 512
    $region33: #{tpu_custom_call.1} parent=1 // pred_fallthru
      _
    // Predicated region
    $region34: #{tpu_custom_call.1} parent=1 // pred_check
      _
    $region35: #{tpu_custom_call.1} parent=1 // pred_check_branch
      %91 = sbr.rel (0) target = $region37
    $region36: #{tpu_custom_call.1} parent=1 // pred_region
      %92 = dma.done [#allocation6], 4096
    $region37: #{tpu_custom_call.1} parent=1 // pred_fallthru
      _
    // Predicated region
    $region38: #{tpu_custom_call.1} parent=1 // pred_check
      _
    $region39: #{tpu_custom_call.1} parent=1 // pred_check_branch
      %94 = sbr.rel (0) target = $region41
    $region40: #{tpu_custom_call.1} parent=1 // pred_region
      %95 = dma.done [#allocation9], 4096
    $region41: #{tpu_custom_call.1} parent=1 // pred_fallthru
      _
    // Predicated region
    $region42: #{tpu_custom_call.1} parent=1 // pred_check
      _
    $region43: #{tpu_custom_call.1} parent=1 // pred_check_branch
      %97 = sbr.rel (0) target = $region45
    $region44: #{tpu_custom_call.1} parent=1 // pred_region
      %98 = dma.done [#allocation9], 2048
    $region45: #{tpu_custom_call.1} parent=1 // pred_fallthru
      _
    // Predicated region
    $region46: #{tpu_custom_call.1} parent=1 // pred_check
      _
    $region47: #{tpu_custom_call.1} parent=1 // pred_check_branch
      %100 = sbr.rel (0) target = $region49
    $region48: #{tpu_custom_call.1} parent=1 // pred_region
      %101 = dma.done [#allocation12], 256
    $region49: #{tpu_custom_call.1} parent=1 // pred_fallthru
      _
    %v103 = vld [vmem:[#allocation2] sm:$0xff]
    %v104 = vpack.c.bf16 %v103, %v103
    %v105 = vld [vmem:[#allocation5] sm:$0xff]
    %v106 = vld [vmem:[#allocation5 + $0x8] sm:$0xff]
    %v107 = vld [vmem:[#allocation5 + $0x10] sm:$0xff]
    %v108 = vld [vmem:[#allocation5 + $0x18] sm:$0xff]
    %v113 = vunpack.c.l.b16 %v105
    %v114 = vunpack.c.h.b16 %v105
    %v115 = vunpack.c.l.b16 %v106
    %v116 = vunpack.c.h.b16 %v106
    %v117 = vunpack.c.l.b16 %v107
    %v118 = vunpack.c.h.b16 %v107
    %v119 = vunpack.c.l.b16 %v108
    %v120 = vunpack.c.h.b16 %v108
    %v121 = vpack.c.b16 %v115, %v113
    %v122 = vpack.c.b16 %v116, %v114
    %v123 = vpack.c.b16 %v119, %v117
    %v124 = vpack.c.b16 %v120, %v118
    %vm129 = vcmask 261120
    %v131 = vsel %vm129, %v104, 0
    %133 = vmatprep.subr.bf16.mxu0 0
    %134 = vmatpush1.bf16.msra.mxu0 0
    %135 = vmatprep.subr.bf16.mxu0 0
    %136 = vmatpush1.bf16.msra.mxu0 0
    %137 = vmatprep.subr.bf16.mxu0 0
    %138 = vmatpush1.bf16.msra.mxu0 0
    %139 = vmatprep.subr.bf16.mxu0 0
    %140 = vmatpush1.bf16.msra.mxu0 0
    %141 = vmatprep.subr.bf16.mxu0 0
    %142 = vmatpush1.bf16.msra.mxu0 0
    %143 = vmatprep.subr.bf16.mxu0 0
    %144 = vmatpush1.bf16.msra.mxu0 0
    %145 = vmatprep.subr.bf16.mxu0 %v124
    %146 = vmatpush1.bf16.msra.mxu0 %v123
    %147 = vmatprep.subr.bf16.mxu0 %v122
    %148 = vmatpush1.bf16.msra.mxu0 %v121
    %149 = vmatprep.subr.bf16.mxu0 0
    %150 = vmatpush2.bf16.msra.mxu0 0
    %151 = vmatprep.subr.bf16.mxu0 0
    %152 = vmatpush2.bf16.msra.mxu0 0
    %153 = vmatprep.subr.bf16.mxu0 0
    %154 = vmatpush2.bf16.msra.mxu0 0
    %155 = vmatprep.subr.bf16.mxu0 0
    %156 = vmatpush2.bf16.msra.mxu0 0
    %157 = vmatprep.subr.bf16.mxu0 0
    %158 = vmatpush2.bf16.msra.mxu0 0
    %159 = vmatprep.subr.bf16.mxu0 0
    %160 = vmatpush2.bf16.msra.mxu0 0
    %161 = vmatprep.subr.bf16.mxu0 0
    %162 = vmatpush2.bf16.msra.mxu0 0
    %163 = vmatprep.subr.bf16.mxu0 0
    %164 = vmatpush2.bf16.msra.mxu0 0
    %165 = vmatprep.mubr.bf16.mxu0 0
    %166 = vmatmul.mubr.bf16.gmra.mxu0 %v131
    %v167 = vpop.f32.mrf.mxu0
    %v168 = vadd.f32 0.0, %v167
    %v169 = vpop.f32.mrf.mxu0
    %v170 = vadd.f32 0.0, %v169
    %v171 = vpop.f32.mrf.mxu0
    %v172 = vpop.f32.mrf.mxu0
    %173 = vdwg.mxu0
    %v174 = vrot.slane %v168, 4
    %v175 = vadd.f32 %v168, %v174
    %v176 = vrot.slane %v175, 2
    %v177 = vadd.f32 %v175, %v176
    %v178 = vrot.slane %v177, 1
    %v179 = vadd.f32 %v177, %v178
    %v180 = vrot.slane %v170, 4
    %v181 = vadd.f32 %v170, %v180
    %v182 = vrot.slane %v181, 2
    %v183 = vadd.f32 %v181, %v182
    %v184 = vrot.slane %v183, 1
    %v185 = vadd.f32 %v183, %v184
    %v186 = vmul.f32 %v179, 0.125
    %v187 = vmul.f32 %v185, 0.125
    %v188 = vmul.f32 %v168, %v168
    %v189 = vmul.f32 %v170, %v170
    %v190 = vrot.slane %v188, 4
    %v191 = vadd.f32 %v188, %v190
    %v192 = vrot.slane %v191, 2
    %v193 = vadd.f32 %v191, %v192
    %v194 = vrot.slane %v193, 1
    %v195 = vadd.f32 %v193, %v194
    %v196 = vrot.slane %v189, 4
    %v197 = vadd.f32 %v189, %v196
    %v198 = vrot.slane %v197, 2
    %v199 = vadd.f32 %v197, %v198
    %v200 = vrot.slane %v199, 1
    %v201 = vadd.f32 %v199, %v200
    %v202 = vmul.f32 %v195, 0.125
    %v203 = vmul.f32 %v201, 0.125
    %v204 = vmul.f32 %v186, %v186
    %v205 = vmul.f32 %v187, %v187
    %v206 = vsub.f32 %v202, %v204
    %v207 = vsub.f32 %v203, %v205
    %v208 = vld [vmem:[#allocation11] sm:$0x3]
    %v209 = vld [vmem:[#allocation11 + $0x8] sm:$0x3]
    %v210 = vadd.f32 %v206, 1e-05
    %v211 = vadd.f32 %v207, 1e-05
    %v212 = vrsqrt.pop %v210
    %v213 = vrsqrt.pop %v211
    %v214 = vmul.f32 %v208, %v212
    %v215 = vmul.f32 %v209, %v213
    %v216 = vmul.f32 %v186, %v214
    %v217 = vmul.f32 %v187, %v215
    %v220 = vrot.slane %v216, 7
    %v221 = vrot.slane %v217, 7
    %v224 = vsub.f32 %v208, %v220
    %v225 = vsub.f32 %v209, %v221
    %v226 = vlaneseq
    %v227 = vshrl.u32 %v226, 7
    %v228 = vsub.s32 0, %v227
    %v229 = vrot.slane %v214, %v228
    %v230 = vlaneseq
    %v231 = vshrl.u32 %v230, 7
    %v232 = vsub.s32 0, %v231
    %v233 = vrot.slane %v215, %v232
    %v234 = vmul.f32 %v168, %v229
    %v235 = vmul.f32 %v170, %v233
    %v236 = vlaneseq
    %v237 = vshrl.u32 %v236, 7
    %v238 = vsub.s32 1, %v237
    %v239 = vrot.slane %v224, %v238
    %v240 = vlaneseq
    %v241 = vshrl.u32 %v240, 7
    %v242 = vsub.s32 1, %v241
    %v243 = vrot.slane %v225, %v242
    %v244 = vadd.f32 %v234, %v239
    %v245 = vadd.f32 %v235, %v243
    %v246 = vmax.f32 %v244, 0.0
    %v247 = vmax.f32 %v245, 0.0
    %v248 = vpack.c.bf16 %v246, %v246
    %v249 = vpack.c.bf16 %v247, %v247
    %v250 = vld [vmem:[#allocation7] sm:$0xff]
    %v251 = vld [vmem:[#allocation7 + $0x8] sm:$0xff]
    %v252 = vld [vmem:[#allocation7 + $0x10] sm:$0xff]
    %v253 = vld [vmem:[#allocation7 + $0x18] sm:$0xff]
    %v254 = vld [vmem:[#allocation7 + $0x20] sm:$0xff]
    %v255 = vld [vmem:[#allocation7 + $0x28] sm:$0xff]
    %v256 = vld [vmem:[#allocation7 + $0x30] sm:$0xff]
    %v257 = vld [vmem:[#allocation7 + $0x38] sm:$0xff]
    %v258 = vld [vmem:[#allocation7 + $0x40] sm:$0xff]
    %v259 = vld [vmem:[#allocation7 + $0x48] sm:$0xff]
    %v260 = vld [vmem:[#allocation7 + $0x50] sm:$0xff]
    %v261 = vld [vmem:[#allocation7 + $0x58] sm:$0xff]
    %v262 = vld [vmem:[#allocation7 + $0x60] sm:$0xff]
    %v263 = vld [vmem:[#allocation7 + $0x68] sm:$0xff]
    %v264 = vld [vmem:[#allocation7 + $0x70] sm:$0xff]
    %v265 = vld [vmem:[#allocation7 + $0x78] sm:$0xff]
    %v266 = vld [vmem:[#allocation7 + $0x80] sm:$0xff]
    %v267 = vld [vmem:[#allocation7 + $0x88] sm:$0xff]
    %v268 = vld [vmem:[#allocation7 + $0x90] sm:$0xff]
    %v269 = vld [vmem:[#allocation7 + $0x98] sm:$0xff]
    %v270 = vld [vmem:[#allocation7 + $0xa0] sm:$0xff]
    %v271 = vld [vmem:[#allocation7 + $0xa8] sm:$0xff]
    %v272 = vld [vmem:[#allocation7 + $0xb0] sm:$0xff]
    %v273 = vld [vmem:[#allocation7 + $0xb8] sm:$0xff]
    %v274 = vld [vmem:[#allocation7 + $0xc0] sm:$0xff]
    %v275 = vld [vmem:[#allocation7 + $0xc8] sm:$0xff]
    %v276 = vld [vmem:[#allocation7 + $0xd0] sm:$0xff]
    %v277 = vld [vmem:[#allocation7 + $0xd8] sm:$0xff]
    %v278 = vld [vmem:[#allocation7 + $0xe0] sm:$0xff]
    %v279 = vld [vmem:[#allocation7 + $0xe8] sm:$0xff]
    %v280 = vld [vmem:[#allocation7 + $0xf0] sm:$0xff]
    %v281 = vld [vmem:[#allocation7 + $0xf8] sm:$0xff]
    %v314 = vunpack.c.l.b16 %v250
    %v315 = vunpack.c.h.b16 %v250
    %v316 = vunpack.c.l.b16 %v251
    %v317 = vunpack.c.h.b16 %v251
    %v318 = vunpack.c.l.b16 %v252
    %v319 = vunpack.c.h.b16 %v252
    %v320 = vunpack.c.l.b16 %v253
    %v321 = vunpack.c.h.b16 %v253
    %v322 = vunpack.c.l.b16 %v254
    %v323 = vunpack.c.h.b16 %v254
    %v324 = vunpack.c.l.b16 %v255
    %v325 = vunpack.c.h.b16 %v255
    %v326 = vunpack.c.l.b16 %v256
    %v327 = vunpack.c.h.b16 %v256
    %v328 = vunpack.c.l.b16 %v257
    %v329 = vunpack.c.h.b16 %v257
    %v330 = vunpack.c.l.b16 %v258
    %v331 = vunpack.c.h.b16 %v258
    %v332 = vunpack.c.l.b16 %v259
    %v333 = vunpack.c.h.b16 %v259
    %v334 = vunpack.c.l.b16 %v260
    %v335 = vunpack.c.h.b16 %v260
    %v336 = vunpack.c.l.b16 %v261
    %v337 = vunpack.c.h.b16 %v261
    %v338 = vunpack.c.l.b16 %v262
    %v339 = vunpack.c.h.b16 %v262
    %v340 = vunpack.c.l.b16 %v263
    %v341 = vunpack.c.h.b16 %v263
    %v342 = vunpack.c.l.b16 %v264
    %v343 = vunpack.c.h.b16 %v264
    %v344 = vunpack.c.l.b16 %v265
    %v345 = vunpack.c.h.b16 %v265
    %v346 = vunpack.c.l.b16 %v266
    %v347 = vunpack.c.h.b16 %v266
    %v348 = vunpack.c.l.b16 %v267
    %v349 = vunpack.c.h.b16 %v267
    %v350 = vunpack.c.l.b16 %v268
    %v351 = vunpack.c.h.b16 %v268
    %v352 = vunpack.c.l.b16 %v269
    %v353 = vunpack.c.h.b16 %v269
    %v354 = vunpack.c.l.b16 %v270
    %v355 = vunpack.c.h.b16 %v270
    %v356 = vunpack.c.l.b16 %v271
    %v357 = vunpack.c.h.b16 %v271
    %v358 = vunpack.c.l.b16 %v272
    %v359 = vunpack.c.h.b16 %v272
    %v360 = vunpack.c.l.b16 %v273
    %v361 = vunpack.c.h.b16 %v273
    %v362 = vunpack.c.l.b16 %v274
    %v363 = vunpack.c.h.b16 %v274
    %v364 = vunpack.c.l.b16 %v275
    %v365 = vunpack.c.h.b16 %v275
    %v366 = vunpack.c.l.b16 %v276
    %v367 = vunpack.c.h.b16 %v276
    %v368 = vunpack.c.l.b16 %v277
    %v369 = vunpack.c.h.b16 %v277
    %v370 = vunpack.c.l.b16 %v278
    %v371 = vunpack.c.h.b16 %v278
    %v372 = vunpack.c.l.b16 %v279
    %v373 = vunpack.c.h.b16 %v279
    %v374 = vunpack.c.l.b16 %v280
    %v375 = vunpack.c.h.b16 %v280
    %v376 = vunpack.c.l.b16 %v281
    %v377 = vunpack.c.h.b16 %v281
    %v378 = vpack.c.b16 %v316, %v314
    %v379 = vpack.c.b16 %v317, %v315
    %v380 = vpack.c.b16 %v320, %v318
    %v381 = vpack.c.b16 %v321, %v319
    %v382 = vpack.c.b16 %v324, %v322
    %v383 = vpack.c.b16 %v325, %v323
    %v384 = vpack.c.b16 %v328, %v326
    %v385 = vpack.c.b16 %v329, %v327
    %v386 = vpack.c.b16 %v332, %v330
    %v387 = vpack.c.b16 %v333, %v331
    %v388 = vpack.c.b16 %v336, %v334
    %v389 = vpack.c.b16 %v337, %v335
    %v390 = vpack.c.b16 %v340, %v338
    %v391 = vpack.c.b16 %v341, %v339
    %v392 = vpack.c.b16 %v344, %v342
    %v393 = vpack.c.b16 %v345, %v343
    %v394 = vpack.c.b16 %v348, %v346
    %v395 = vpack.c.b16 %v349, %v347
    %v396 = vpack.c.b16 %v352, %v350
    %v397 = vpack.c.b16 %v353, %v351
    %v398 = vpack.c.b16 %v356, %v354
    %v399 = vpack.c.b16 %v357, %v355
    %v400 = vpack.c.b16 %v360, %v358
    %v401 = vpack.c.b16 %v361, %v359
    %v402 = vpack.c.b16 %v364, %v362
    %v403 = vpack.c.b16 %v365, %v363
    %v404 = vpack.c.b16 %v368, %v366
    %v405 = vpack.c.b16 %v369, %v367
    %v406 = vpack.c.b16 %v372, %v370
    %v407 = vpack.c.b16 %v373, %v371
    %v408 = vpack.c.b16 %v376, %v374
    %v409 = vpack.c.b16 %v377, %v375
    %442 = vmatprep.subr.bf16.mxu0 %v393
    %443 = vmatpush1.bf16.msra.mxu0 %v392
    %444 = vmatprep.subr.bf16.mxu0 %v391
    %445 = vmatpush1.bf16.msra.mxu0 %v390
    %446 = vmatprep.subr.bf16.mxu0 %v389
    %447 = vmatpush1.bf16.msra.mxu0 %v388
    %448 = vmatprep.subr.bf16.mxu0 %v387
    %449 = vmatpush1.bf16.msra.mxu0 %v386
    %450 = vmatprep.subr.bf16.mxu0 %v385
    %451 = vmatpush1.bf16.msra.mxu0 %v384
    %452 = vmatprep.subr.bf16.mxu0 %v383
    %453 = vmatpush1.bf16.msra.mxu0 %v382
    %454 = vmatprep.subr.bf16.mxu0 %v381
    %455 = vmatpush1.bf16.msra.mxu0 %v380
    %456 = vmatprep.subr.bf16.mxu0 %v379
    %457 = vmatpush1.bf16.msra.mxu0 %v378
    %458 = vmatprep.subr.bf16.mxu0 %v409
    %459 = vmatpush2.bf16.msra.mxu0 %v408
    %460 = vmatprep.subr.bf16.mxu0 %v407
    %461 = vmatpush2.bf16.msra.mxu0 %v406
    %462 = vmatprep.subr.bf16.mxu0 %v405
    %463 = vmatpush2.bf16.msra.mxu0 %v404
    %464 = vmatprep.subr.bf16.mxu0 %v403
    %465 = vmatpush2.bf16.msra.mxu0 %v402
    %466 = vmatprep.subr.bf16.mxu0 %v401
    %467 = vmatpush2.bf16.msra.mxu0 %v400
    %468 = vmatprep.subr.bf16.mxu0 %v399
    %469 = vmatpush2.bf16.msra.mxu0 %v398
    %470 = vmatprep.subr.bf16.mxu0 %v397
    %471 = vmatpush2.bf16.msra.mxu0 %v396
    %472 = vmatprep.subr.bf16.mxu0 %v395
    %473 = vmatpush2.bf16.msra.mxu0 %v394
    %474 = vmatprep.mubr.bf16.mxu0 %v249
    %475 = vmatmul.mubr.bf16.gmra.mxu0 %v248
    %v476 = vpop.f32.mrf.mxu0
    %v477 = vadd.f32 0.0, %v476
    %v478 = vpop.f32.mrf.mxu0
    %v479 = vadd.f32 0.0, %v478
    %v480 = vpop.f32.mrf.mxu0
    %v481 = vpop.f32.mrf.mxu0
    %482 = vdwg.mxu0
    %v483 = vrot.slane %v477, 4
    %v484 = vadd.f32 %v477, %v483
    %v485 = vrot.slane %v484, 2
    %v486 = vadd.f32 %v484, %v485
    %v487 = vrot.slane %v486, 1
    %v488 = vadd.f32 %v486, %v487
    %v489 = vrot.slane %v479, 4
    %v490 = vadd.f32 %v479, %v489
    %v491 = vrot.slane %v490, 2
    %v492 = vadd.f32 %v490, %v491
    %v493 = vrot.slane %v492, 1
    %v494 = vadd.f32 %v492, %v493
    %v495 = vmul.f32 %v488, 0.125
    %v496 = vmul.f32 %v494, 0.125
    %v497 = vmul.f32 %v477, %v477
    %v498 = vmul.f32 %v479, %v479
    %v499 = vrot.slane %v497, 4
    %v500 = vadd.f32 %v497, %v499
    %v501 = vrot.slane %v500, 2
    %v502 = vadd.f32 %v500, %v501
    %v503 = vrot.slane %v502, 1
    %v504 = vadd.f32 %v502, %v503
    %v505 = vrot.slane %v498, 4
    %v506 = vadd.f32 %v498, %v505
    %v507 = vrot.slane %v506, 2
    %v508 = vadd.f32 %v506, %v507
    %v509 = vrot.slane %v508, 1
    %v510 = vadd.f32 %v508, %v509
    %v511 = vmul.f32 %v504, 0.125
    %v512 = vmul.f32 %v510, 0.125
    %v513 = vmul.f32 %v495, %v495
    %v514 = vmul.f32 %v496, %v496
    %v515 = vsub.f32 %v511, %v513
    %v516 = vsub.f32 %v512, %v514
    %v517 = vld [vmem:[#allocation11] sm:$0xc]
    %v518 = vld [vmem:[#allocation11 + $0x8] sm:$0xc]
    %v519 = vadd.f32 %v515, 1e-05
    %v520 = vadd.f32 %v516, 1e-05
    %v521 = vrsqrt.pop %v519
    %v522 = vrsqrt.pop %v520
    %v523 = vmul.f32 %v517, %v521
    %v524 = vmul.f32 %v518, %v522
    %v525 = vmul.f32 %v495, %v523
    %v526 = vmul.f32 %v496, %v524
    %v529 = vrot.slane %v525, 7
    %v530 = vrot.slane %v526, 7
    %v533 = vsub.f32 %v517, %v529
    %v534 = vsub.f32 %v518, %v530
    %v535 = vlaneseq
    %v536 = vshrl.u32 %v535, 7
    %v537 = vsub.s32 2, %v536
    %v538 = vrot.slane %v523, %v537
    %v539 = vlaneseq
    %v540 = vshrl.u32 %v539, 7
    %v541 = vsub.s32 2, %v540
    %v542 = vrot.slane %v524, %v541
    %v543 = vmul.f32 %v477, %v538
    %v544 = vmul.f32 %v479, %v542
    %v545 = vlaneseq
    %v546 = vshrl.u32 %v545, 7
    %v547 = vsub.s32 3, %v546
    %v548 = vrot.slane %v533, %v547
    %v549 = vlaneseq
    %v550 = vshrl.u32 %v549, 7
    %v551 = vsub.s32 3, %v550
    %v552 = vrot.slane %v534, %v551
    %v553 = vadd.f32 %v543, %v548
    %v554 = vadd.f32 %v544, %v552
    %v555 = vmax.f32 %v553, 0.0
    %v556 = vmax.f32 %v554, 0.0
    %v557 = vpack.c.bf16 %v555, %v555
    %v558 = vpack.c.bf16 %v556, %v556
    %v559 = vld [vmem:[#allocation8] sm:$0xff]
    %v560 = vld [vmem:[#allocation8 + $0x8] sm:$0xff]
    %v561 = vld [vmem:[#allocation8 + $0x10] sm:$0xff]
    %v562 = vld [vmem:[#allocation8 + $0x18] sm:$0xff]
    %v563 = vld [vmem:[#allocation8 + $0x20] sm:$0xff]
    %v564 = vld [vmem:[#allocation8 + $0x28] sm:$0xff]
    %v565 = vld [vmem:[#allocation8 + $0x30] sm:$0xff]
    %v566 = vld [vmem:[#allocation8 + $0x38] sm:$0xff]
    %v567 = vld [vmem:[#allocation8 + $0x40] sm:$0xff]
    %v568 = vld [vmem:[#allocation8 + $0x48] sm:$0xff]
    %v569 = vld [vmem:[#allocation8 + $0x50] sm:$0xff]
    %v570 = vld [vmem:[#allocation8 + $0x58] sm:$0xff]
    %v571 = vld [vmem:[#allocation8 + $0x60] sm:$0xff]
    %v572 = vld [vmem:[#allocation8 + $0x68] sm:$0xff]
    %v573 = vld [vmem:[#allocation8 + $0x70] sm:$0xff]
    %v574 = vld [vmem:[#allocation8 + $0x78] sm:$0xff]
    %v575 = vld [vmem:[#allocation8 + $0x80] sm:$0xff]
    %v576 = vld [vmem:[#allocation8 + $0x88] sm:$0xff]
    %v577 = vld [vmem:[#allocation8 + $0x90] sm:$0xff]
    %v578 = vld [vmem:[#allocation8 + $0x98] sm:$0xff]
    %v579 = vld [vmem:[#allocation8 + $0xa0] sm:$0xff]
    %v580 = vld [vmem:[#allocation8 + $0xa8] sm:$0xff]
    %v581 = vld [vmem:[#allocation8 + $0xb0] sm:$0xff]
    %v582 = vld [vmem:[#allocation8 + $0xb8] sm:$0xff]
    %v583 = vld [vmem:[#allocation8 + $0xc0] sm:$0xff]
    %v584 = vld [vmem:[#allocation8 + $0xc8] sm:$0xff]
    %v585 = vld [vmem:[#allocation8 + $0xd0] sm:$0xff]
    %v586 = vld [vmem:[#allocation8 + $0xd8] sm:$0xff]
    %v587 = vld [vmem:[#allocation8 + $0xe0] sm:$0xff]
    %v588 = vld [vmem:[#allocation8 + $0xe8] sm:$0xff]
    %v589 = vld [vmem:[#allocation8 + $0xf0] sm:$0xff]
    %v590 = vld [vmem:[#allocation8 + $0xf8] sm:$0xff]
    %v623 = vunpack.c.l.b16 %v559
    %v624 = vunpack.c.h.b16 %v559
    %v625 = vunpack.c.l.b16 %v560
    %v626 = vunpack.c.h.b16 %v560
    %v627 = vunpack.c.l.b16 %v561
    %v628 = vunpack.c.h.b16 %v561
    %v629 = vunpack.c.l.b16 %v562
    %v630 = vunpack.c.h.b16 %v562
    %v631 = vunpack.c.l.b16 %v563
    %v632 = vunpack.c.h.b16 %v563
    %v633 = vunpack.c.l.b16 %v564
    %v634 = vunpack.c.h.b16 %v564
    %v635 = vunpack.c.l.b16 %v565
    %v636 = vunpack.c.h.b16 %v565
    %v637 = vunpack.c.l.b16 %v566
    %v638 = vunpack.c.h.b16 %v566
    %v639 = vunpack.c.l.b16 %v567
    %v640 = vunpack.c.h.b16 %v567
    %v641 = vunpack.c.l.b16 %v568
    %v642 = vunpack.c.h.b16 %v568
    %v643 = vunpack.c.l.b16 %v569
    %v644 = vunpack.c.h.b16 %v569
    %v645 = vunpack.c.l.b16 %v570
    %v646 = vunpack.c.h.b16 %v570
    %v647 = vunpack.c.l.b16 %v571
    %v648 = vunpack.c.h.b16 %v571
    %v649 = vunpack.c.l.b16 %v572
    %v650 = vunpack.c.h.b16 %v572
    %v651 = vunpack.c.l.b16 %v573
    %v652 = vunpack.c.h.b16 %v573
    %v653 = vunpack.c.l.b16 %v574
    %v654 = vunpack.c.h.b16 %v574
    %v655 = vunpack.c.l.b16 %v575
    %v656 = vunpack.c.h.b16 %v575
    %v657 = vunpack.c.l.b16 %v576
    %v658 = vunpack.c.h.b16 %v576
    %v659 = vunpack.c.l.b16 %v577
    %v660 = vunpack.c.h.b16 %v577
    %v661 = vunpack.c.l.b16 %v578
    %v662 = vunpack.c.h.b16 %v578
    %v663 = vunpack.c.l.b16 %v579
    %v664 = vunpack.c.h.b16 %v579
    %v665 = vunpack.c.l.b16 %v580
    %v666 = vunpack.c.h.b16 %v580
    %v667 = vunpack.c.l.b16 %v581
    %v668 = vunpack.c.h.b16 %v581
    %v669 = vunpack.c.l.b16 %v582
    %v670 = vunpack.c.h.b16 %v582
    %v671 = vunpack.c.l.b16 %v583
    %v672 = vunpack.c.h.b16 %v583
    %v673 = vunpack.c.l.b16 %v584
    %v674 = vunpack.c.h.b16 %v584
    %v675 = vunpack.c.l.b16 %v585
    %v676 = vunpack.c.h.b16 %v585
    %v677 = vunpack.c.l.b16 %v586
    %v678 = vunpack.c.h.b16 %v586
    %v679 = vunpack.c.l.b16 %v587
    %v680 = vunpack.c.h.b16 %v587
    %v681 = vunpack.c.l.b16 %v588
    %v682 = vunpack.c.h.b16 %v588
    %v683 = vunpack.c.l.b16 %v589
    %v684 = vunpack.c.h.b16 %v589
    %v685 = vunpack.c.l.b16 %v590
    %v686 = vunpack.c.h.b16 %v590
    %v687 = vpack.c.b16 %v625, %v623
    %v688 = vpack.c.b16 %v626, %v624
    %v689 = vpack.c.b16 %v629, %v627
    %v690 = vpack.c.b16 %v630, %v628
    %v691 = vpack.c.b16 %v633, %v631
    %v692 = vpack.c.b16 %v634, %v632
    %v693 = vpack.c.b16 %v637, %v635
    %v694 = vpack.c.b16 %v638, %v636
    %v695 = vpack.c.b16 %v641, %v639
    %v696 = vpack.c.b16 %v642, %v640
    %v697 = vpack.c.b16 %v645, %v643
    %v698 = vpack.c.b16 %v646, %v644
    %v699 = vpack.c.b16 %v649, %v647
    %v700 = vpack.c.b16 %v650, %v648
    %v701 = vpack.c.b16 %v653, %v651
    %v702 = vpack.c.b16 %v654, %v652
    %v703 = vpack.c.b16 %v657, %v655
    %v704 = vpack.c.b16 %v658, %v656
    %v705 = vpack.c.b16 %v661, %v659
    %v706 = vpack.c.b16 %v662, %v660
    %v707 = vpack.c.b16 %v665, %v663
    %v708 = vpack.c.b16 %v666, %v664
    %v709 = vpack.c.b16 %v669, %v667
    %v710 = vpack.c.b16 %v670, %v668
    %v711 = vpack.c.b16 %v673, %v671
    %v712 = vpack.c.b16 %v674, %v672
    %v713 = vpack.c.b16 %v677, %v675
    %v714 = vpack.c.b16 %v678, %v676
    %v715 = vpack.c.b16 %v681, %v679
    %v716 = vpack.c.b16 %v682, %v680
    %v717 = vpack.c.b16 %v685, %v683
    %v718 = vpack.c.b16 %v686, %v684
    %751 = vmatprep.subr.bf16.mxu0 %v702
    %752 = vmatpush1.bf16.msra.mxu0 %v701
    %753 = vmatprep.subr.bf16.mxu0 %v700
    %754 = vmatpush1.bf16.msra.mxu0 %v699
    %755 = vmatprep.subr.bf16.mxu0 %v698
    %756 = vmatpush1.bf16.msra.mxu0 %v697
    %757 = vmatprep.subr.bf16.mxu0 %v696
    %758 = vmatpush1.bf16.msra.mxu0 %v695
    %759 = vmatprep.subr.bf16.mxu0 %v694
    %760 = vmatpush1.bf16.msra.mxu0 %v693
    %761 = vmatprep.subr.bf16.mxu0 %v692
    %762 = vmatpush1.bf16.msra.mxu0 %v691
    %763 = vmatprep.subr.bf16.mxu0 %v690
    %764 = vmatpush1.bf16.msra.mxu0 %v689
    %765 = vmatprep.subr.bf16.mxu0 %v688
    %766 = vmatpush1.bf16.msra.mxu0 %v687
    %767 = vmatprep.subr.bf16.mxu0 %v718
    %768 = vmatpush2.bf16.msra.mxu0 %v717
    %769 = vmatprep.subr.bf16.mxu0 %v716
    %770 = vmatpush2.bf16.msra.mxu0 %v715
    %771 = vmatprep.subr.bf16.mxu0 %v714
    %772 = vmatpush2.bf16.msra.mxu0 %v713
    %773 = vmatprep.subr.bf16.mxu0 %v712
    %774 = vmatpush2.bf16.msra.mxu0 %v711
    %775 = vmatprep.subr.bf16.mxu0 %v710
    %776 = vmatpush2.bf16.msra.mxu0 %v709
    %777 = vmatprep.subr.bf16.mxu0 %v708
    %778 = vmatpush2.bf16.msra.mxu0 %v707
    %779 = vmatprep.subr.bf16.mxu0 %v706
    %780 = vmatpush2.bf16.msra.mxu0 %v705
    %781 = vmatprep.subr.bf16.mxu0 %v704
    %782 = vmatpush2.bf16.msra.mxu0 %v703
    %783 = vmatprep.mubr.bf16.mxu0 %v558
    %784 = vmatmul.mubr.bf16.gmra.mxu0 %v557
    %v785 = vpop.f32.mrf.mxu0
    %v786 = vadd.f32 0.0, %v785
    %v787 = vpop.f32.mrf.mxu0
    %v788 = vadd.f32 0.0, %v787
    %v789 = vpop.f32.mrf.mxu0
    %v790 = vpop.f32.mrf.mxu0
    %791 = vdwg.mxu0
    %v792 = vrot.slane %v786, 4
    %v793 = vadd.f32 %v786, %v792
    %v794 = vrot.slane %v793, 2
    %v795 = vadd.f32 %v793, %v794
    %v796 = vrot.slane %v795, 1
    %v797 = vadd.f32 %v795, %v796
    %v798 = vrot.slane %v788, 4
    %v799 = vadd.f32 %v788, %v798
    %v800 = vrot.slane %v799, 2
    %v801 = vadd.f32 %v799, %v800
    %v802 = vrot.slane %v801, 1
    %v803 = vadd.f32 %v801, %v802
    %v804 = vmul.f32 %v797, 0.125
    %v805 = vmul.f32 %v803, 0.125
    %v806 = vmul.f32 %v786, %v786
    %v807 = vmul.f32 %v788, %v788
    %v808 = vrot.slane %v806, 4
    %v809 = vadd.f32 %v806, %v808
    %v810 = vrot.slane %v809, 2
    %v811 = vadd.f32 %v809, %v810
    %v812 = vrot.slane %v811, 1
    %v813 = vadd.f32 %v811, %v812
    %v814 = vrot.slane %v807, 4
    %v815 = vadd.f32 %v807, %v814
    %v816 = vrot.slane %v815, 2
    %v817 = vadd.f32 %v815, %v816
    %v818 = vrot.slane %v817, 1
    %v819 = vadd.f32 %v817, %v818
    %v820 = vmul.f32 %v813, 0.125
    %v821 = vmul.f32 %v819, 0.125
    %v822 = vmul.f32 %v804, %v804
    %v823 = vmul.f32 %v805, %v805
    %v824 = vsub.f32 %v820, %v822
    %v825 = vsub.f32 %v821, %v823
    %v826 = vld [vmem:[#allocation11] sm:$0x30]
    %v827 = vld [vmem:[#allocation11 + $0x8] sm:$0x30]
    %v828 = vadd.f32 %v824, 1e-05
    %v829 = vadd.f32 %v825, 1e-05
    %v830 = vrsqrt.pop %v828
    %v831 = vrsqrt.pop %v829
    %v832 = vmul.f32 %v826, %v830
    %v833 = vmul.f32 %v827, %v831
    %v834 = vmul.f32 %v804, %v832
    %v835 = vmul.f32 %v805, %v833
    %v838 = vrot.slane %v834, 7
    %v839 = vrot.slane %v835, 7
    %v842 = vsub.f32 %v826, %v838
    %v843 = vsub.f32 %v827, %v839
    %v844 = vlaneseq
    %v845 = vshrl.u32 %v844, 7
    %v846 = vsub.s32 4, %v845
    %v847 = vrot.slane %v832, %v846
    %v848 = vlaneseq
    %v849 = vshrl.u32 %v848, 7
    %v850 = vsub.s32 4, %v849
    %v851 = vrot.slane %v833, %v850
    %v852 = vmul.f32 %v786, %v847
    %v853 = vmul.f32 %v788, %v851
    %v854 = vlaneseq
    %v855 = vshrl.u32 %v854, 7
    %v856 = vsub.s32 5, %v855
    %v857 = vrot.slane %v842, %v856
    %v858 = vlaneseq
    %v859 = vshrl.u32 %v858, 7
    %v860 = vsub.s32 5, %v859
    %v861 = vrot.slane %v843, %v860
    %v862 = vadd.f32 %v852, %v857
    %v863 = vadd.f32 %v853, %v861
    %v864 = vmax.f32 %v862, 0.0
    %v865 = vmax.f32 %v863, 0.0
    %v866 = vpack.c.bf16 %v864, %v864
    %v867 = vpack.c.bf16 %v865, %v865
    %v868 = vld [vmem:[#allocation10] sm:$0xf]
    %v869 = vld [vmem:[#allocation10 + $0x4] sm:$0xf]
    %v870 = vld [vmem:[#allocation10 + $0x8] sm:$0xf]
    %v871 = vld [vmem:[#allocation10 + $0xc] sm:$0xf]
    %v872 = vld [vmem:[#allocation10 + $0x10] sm:$0xf]
    %v873 = vld [vmem:[#allocation10 + $0x14] sm:$0xf]
    %v874 = vld [vmem:[#allocation10 + $0x18] sm:$0xf]
    %v875 = vld [vmem:[#allocation10 + $0x1c] sm:$0xf]
    %v876 = vld [vmem:[#allocation10 + $0x20] sm:$0xf]
    %v877 = vld [vmem:[#allocation10 + $0x24] sm:$0xf]
    %v878 = vld [vmem:[#allocation10 + $0x28] sm:$0xf]
    %v879 = vld [vmem:[#allocation10 + $0x2c] sm:$0xf]
    %v880 = vld [vmem:[#allocation10 + $0x30] sm:$0xf]
    %v881 = vld [vmem:[#allocation10 + $0x34] sm:$0xf]
    %v882 = vld [vmem:[#allocation10 + $0x38] sm:$0xf]
    %v883 = vld [vmem:[#allocation10 + $0x3c] sm:$0xf]
    %v884 = vld [vmem:[#allocation10 + $0x40] sm:$0xf]
    %v885 = vld [vmem:[#allocation10 + $0x44] sm:$0xf]
    %v886 = vld [vmem:[#allocation10 + $0x48] sm:$0xf]
    %v887 = vld [vmem:[#allocation10 + $0x4c] sm:$0xf]
    %v888 = vld [vmem:[#allocation10 + $0x50] sm:$0xf]
    %v889 = vld [vmem:[#allocation10 + $0x54] sm:$0xf]
    %v890 = vld [vmem:[#allocation10 + $0x58] sm:$0xf]
    %v891 = vld [vmem:[#allocation10 + $0x5c] sm:$0xf]
    %v892 = vld [vmem:[#allocation10 + $0x60] sm:$0xf]
    %v893 = vld [vmem:[#allocation10 + $0x64] sm:$0xf]
    %v894 = vld [vmem:[#allocation10 + $0x68] sm:$0xf]
    %v895 = vld [vmem:[#allocation10 + $0x6c] sm:$0xf]
    %v896 = vld [vmem:[#allocation10 + $0x70] sm:$0xf]
    %v897 = vld [vmem:[#allocation10 + $0x74] sm:$0xf]
    %v898 = vld [vmem:[#allocation10 + $0x78] sm:$0xf]
    %v899 = vld [vmem:[#allocation10 + $0x7c] sm:$0xf]
    %v932 = vunpack.c.l.b16 %v868
    %v933 = vunpack.c.l.b16 %v869
    %v934 = vunpack.c.l.b16 %v870
    %v935 = vunpack.c.l.b16 %v871
    %v936 = vunpack.c.l.b16 %v872
    %v937 = vunpack.c.l.b16 %v873
    %v938 = vunpack.c.l.b16 %v874
    %v939 = vunpack.c.l.b16 %v875
    %v940 = vunpack.c.l.b16 %v876
    %v941 = vunpack.c.l.b16 %v877
    %v942 = vunpack.c.l.b16 %v878
    %v943 = vunpack.c.l.b16 %v879
    %v944 = vunpack.c.l.b16 %v880
    %v945 = vunpack.c.l.b16 %v881
    %v946 = vunpack.c.l.b16 %v882
    %v947 = vunpack.c.l.b16 %v883
    %v948 = vunpack.c.l.b16 %v884
    %v949 = vunpack.c.l.b16 %v885
    %v950 = vunpack.c.l.b16 %v886
    %v951 = vunpack.c.l.b16 %v887
    %v952 = vunpack.c.l.b16 %v888
    %v953 = vunpack.c.l.b16 %v889
    %v954 = vunpack.c.l.b16 %v890
    %v955 = vunpack.c.l.b16 %v891
    %v956 = vunpack.c.l.b16 %v892
    %v957 = vunpack.c.l.b16 %v893
    %v958 = vunpack.c.l.b16 %v894
    %v959 = vunpack.c.l.b16 %v895
    %v960 = vunpack.c.l.b16 %v896
    %v961 = vunpack.c.l.b16 %v897
    %v962 = vunpack.c.l.b16 %v898
    %v963 = vunpack.c.l.b16 %v899
    %v964 = vpack.c.b16 %v933, %v932
    %v965 = vpack.c.b16 %v935, %v934
    %v966 = vpack.c.b16 %v937, %v936
    %v967 = vpack.c.b16 %v939, %v938
    %v968 = vpack.c.b16 %v941, %v940
    %v969 = vpack.c.b16 %v943, %v942
    %v970 = vpack.c.b16 %v945, %v944
    %v971 = vpack.c.b16 %v947, %v946
    %v972 = vpack.c.b16 %v949, %v948
    %v973 = vpack.c.b16 %v951, %v950
    %v974 = vpack.c.b16 %v953, %v952
    %v975 = vpack.c.b16 %v955, %v954
    %v976 = vpack.c.b16 %v957, %v956
    %v977 = vpack.c.b16 %v959, %v958
    %v978 = vpack.c.b16 %v961, %v960
    %v979 = vpack.c.b16 %v963, %v962
    %996 = vmatprep.subr.bf16.mxu0 0
    %997 = vmatpush1.bf16.msra.mxu0 %v971
    %998 = vmatprep.subr.bf16.mxu0 0
    %999 = vmatpush1.bf16.msra.mxu0 %v970
    %1000 = vmatprep.subr.bf16.mxu0 0
    %1001 = vmatpush1.bf16.msra.mxu0 %v969
    %1002 = vmatprep.subr.bf16.mxu0 0
    %1003 = vmatpush1.bf16.msra.mxu0 %v968
    %1004 = vmatprep.subr.bf16.mxu0 0
    %1005 = vmatpush1.bf16.msra.mxu0 %v967
    %1006 = vmatprep.subr.bf16.mxu0 0
    %1007 = vmatpush1.bf16.msra.mxu0 %v966
    %1008 = vmatprep.subr.bf16.mxu0 0
    %1009 = vmatpush1.bf16.msra.mxu0 %v965
    %1010 = vmatprep.subr.bf16.mxu0 0
    %1011 = vmatpush1.bf16.msra.mxu0 %v964
    %1012 = vmatprep.subr.bf16.mxu0 0
    %1013 = vmatpush2.bf16.msra.mxu0 %v979
    %1014 = vmatprep.subr.bf16.mxu0 0
    %1015 = vmatpush2.bf16.msra.mxu0 %v978
    %1016 = vmatprep.subr.bf16.mxu0 0
    %1017 = vmatpush2.bf16.msra.mxu0 %v977
    %1018 = vmatprep.subr.bf16.mxu0 0
    %1019 = vmatpush2.bf16.msra.mxu0 %v976
    %1020 = vmatprep.subr.bf16.mxu0 0
    %1021 = vmatpush2.bf16.msra.mxu0 %v975
    %1022 = vmatprep.subr.bf16.mxu0 0
    %1023 = vmatpush2.bf16.msra.mxu0 %v974
    %1024 = vmatprep.subr.bf16.mxu0 0
    %1025 = vmatpush2.bf16.msra.mxu0 %v973
    %1026 = vmatprep.subr.bf16.mxu0 0
    %1027 = vmatpush2.bf16.msra.mxu0 %v972
    %1028 = vmatprep.mubr.bf16.mxu0 %v867
    %1029 = vmatmul.mubr.bf16.gmra.mxu0 %v866
    %v1030 = vpop.f32.mrf.mxu0
    %v1031 = vadd.f32 0.0, %v1030
    %v1032 = vpop.f32.mrf.mxu0
    %v1033 = vpop.f32.mrf.mxu0
    %v1034 = vpop.f32.mrf.mxu0
    %1035 = vdwg.mxu0
    %v1036 = vrot.slane %v1031, 4
    %v1037 = vadd.f32 %v1031, %v1036
    %v1038 = vrot.slane %v1037, 2
    %v1039 = vadd.f32 %v1037, %v1038
    %v1040 = vrot.slane %v1039, 1
    %v1041 = vadd.f32 %v1039, %v1040
    %v1042 = vmul.f32 %v1041, 0.125
    %v1043 = vmul.f32 %v1031, %v1031
    %v1044 = vrot.slane %v1043, 4
    %v1045 = vadd.f32 %v1043, %v1044
    %v1046 = vrot.slane %v1045, 2
    %v1047 = vadd.f32 %v1045, %v1046
    %v1048 = vrot.slane %v1047, 1
    %v1049 = vadd.f32 %v1047, %v1048
    %v1050 = vmul.f32 %v1049, 0.125
    %v1051 = vmul.f32 %v1042, %v1042
    %v1052 = vsub.f32 %v1050, %v1051
    %v1053 = vld [vmem:[#allocation11] sm:$0xc0]
    %v1054 = vadd.f32 %v1052, 1e-05
    %v1055 = vrsqrt.pop %v1054
    %v1056 = vmul.f32 %v1053, %v1055
    %v1057 = vmul.f32 %v1042, %v1056
    %v1059 = vrot.slane %v1057, 7
    %v1061 = vsub.f32 %v1053, %v1059
    %v1062 = vlaneseq
    %v1063 = vshrl.u32 %v1062, 7
    %v1064 = vsub.s32 6, %v1063
    %v1065 = vrot.slane %v1056, %v1064
    %v1066 = vmul.f32 %v1031, %v1065
    %v1067 = vlaneseq
    %v1068 = vshrl.u32 %v1067, 7
    %v1069 = vsub.s32 7, %v1068
    %v1070 = vrot.slane %v1061, %v1069
    %v1071 = vadd.f32 %v1066, %v1070
    %1072 = vst [vmem:[#allocation13] sm:$0xff] %v1071
    // Predicated region
    $region50: #{tpu_custom_call.1} parent=1 // pred_check
      _
    $region51: #{tpu_custom_call.1} parent=1 // pred_check_branch
      %1074 = sbr.rel (0) target = $region53
    $region52: #{tpu_custom_call.1} parent=1 // pred_region
      %s1076 = ssub.s32 128, 128
      %1077 = vsyncadd [#allocation4], %s1076
      %s1079 = sshll.u32 [#allocation13], 4
      %s1080 = int_to_ptr.vmem [resolvable:$true] %s1079
      %1082 = dma.vmem_to_hbm [thread:$0]  %s1080, 128, %s6, [#allocation4]
    $region53: #{tpu_custom_call.1} parent=1 // pred_fallthru
      _
    // Predicated region
    $region54: #{tpu_custom_call.1} parent=1 // pred_check
      _
    $region55: #{tpu_custom_call.1} parent=1 // pred_check_branch
      %1084 = sbr.rel (0) target = $region57
    $region56: #{tpu_custom_call.1} parent=1 // pred_region
      %1085 = dma.done [#allocation4], 128
    $region57: #{tpu_custom_call.1} parent=1 // pred_fallthru
      _
    %1086 = vsyncpa [#allocation3], 1
    %1087 = vsyncpa [#allocation6], 1
    %1088 = vsyncpa [#allocation9], 1
    %1089 = vsyncpa [#allocation12], 1
    %1090 = vsyncpa [#allocation4], 1

</llo_original>
